<compile_context>
chip_gen: v6e
topology: v6e:2x2x1
jax: 0.10.0
libtpu: 0.0.40
codegen_flags: <defaults>
</compile_context>

<pallas_src>
import jax
import jax.numpy as jnp
from jax.experimental import pallas as pl
from jax.experimental.pallas import tpu as pltpu

LANE = 128          # vreg lane width
MAX_TILE_B = 512    # batch (lane-axis) tile size for large batches


def mlp_kernel(p_ref, xT_ref, o_ref):
    """Fused Linear(2,2) -> Sigmoid -> Linear(2,1).

    xT_ref: (2, tile_b) VMEM  -- feature-major, batch on lanes.
    o_ref : (1, tile_b) VMEM  -- lane-dense output row.
    p_ref : (9,) f32 SMEM     -- [w1_00, w1_01, w1_10, w1_11,
                                  b1_0, b1_1, w2_0, w2_1, b2_0]
            in PyTorch [out, in] convention: h_i = sum_j w1_ij * x_j + b1_i.
    """
    x0 = xT_ref[0:1, :]          # (1, tile_b)  feature 0 of every example
    x1 = xT_ref[1:2, :]          # (1, tile_b)  feature 1

    # Hidden layer: pure VPU scalar-broadcast FMAs (no MXU for a 2x2 matmul).
    h0 = jax.nn.sigmoid(x0 * p_ref[0] + x1 * p_ref[1] + p_ref[4])
    h1 = jax.nn.sigmoid(x0 * p_ref[2] + x1 * p_ref[3] + p_ref[5])

    # Output layer: Linear(2, 1).
    o_ref[...] = h0 * p_ref[6] + h1 * p_ref[7] + p_ref[8]


def pack_params(w1, b1, w2, b2):
    """Pack all parameters (PyTorch [out, in] layout) into one f32 vector.

    Done once at parameter-creation time so the per-call path has no
    transpose/reshape ops in front of the pallas_call.
    """
    return jnp.concatenate(
        [w1.reshape(-1), b1.reshape(-1), w2.reshape(-1), b2.reshape(-1)]
    ).astype(jnp.float32)        # shape (9,)


def mlp_forward(x, packed_params):
    """x: (B, 2) float32  ->  (B, 1) float32."""
    B = x.shape[0]

    # Pad batch (lane axis) to a lane-aligned tile; tile at 512 for big B.
    b_pad = ((B + LANE - 1) // LANE) * LANE
    if b_pad <= MAX_TILE_B:
        tile_b = b_pad
    else:
        tile_b = MAX_TILE_B
        b_pad = ((b_pad + tile_b - 1) // tile_b) * tile_b

    # (B, 2) -> (2, b_pad): feature-major, batch on lanes (lane-dense output).
    xT = jnp.zeros((2, b_pad), dtype=jnp.float32).at[:, :B].set(x.T)

    out = pl.pallas_call(
        mlp_kernel,
        out_shape=jax.ShapeDtypeStruct((1, b_pad), jnp.float32),
        grid=(b_pad // tile_b,),
        in_specs=[
            # One packed scalar vector in SMEM instead of four padded VMEM DMAs.
            pl.BlockSpec(memory_space=pltpu.MemorySpace.SMEM),
            pl.BlockSpec((2, tile_b), lambda i: (0, i)),
        ],
        out_specs=pl.BlockSpec((1, tile_b), lambda i: (0, i)),
        compiler_params=pltpu.CompilerParams(
            dimension_semantics=("parallel",),
        ),
    )(packed_params, xT)

    return out[0, :B].reshape(B, 1)


def _torch_linear_init(key, out_features, in_features):
    # Deterministic stand-in for nn.Linear default init: U(-1/sqrt(in), 1/sqrt(in)).
    kw, kb = jax.random.split(key)
    bound = 1.0 / jnp.sqrt(in_features)
    w = jax.random.uniform(kw, (out_features, in_features),
                           minval=-bound, maxval=bound, dtype=jnp.float32)
    b = jax.random.uniform(kb, (out_features,),
                           minval=-bound, maxval=bound, dtype=jnp.float32)
    return w, b


if __name__ == "__main__":
    key = jax.random.PRNGKey(0)
    k1, k2 = jax.random.split(key)

    # Parameters: Linear(2, 2) and Linear(2, 1), PyTorch [out, in] convention.
    w1, b1 = _torch_linear_init(k1, 2, 2)
    w2, b2 = _torch_linear_init(k2, 1, 2)
    params = pack_params(w1, b1, w2, b2)     # packed once, reused every call

    # Input: the XOR truth-table rows, as in the reference script.
    x = jnp.array([[0.0, 0.0], [0.0, 1.0], [1.0, 0.0], [1.0, 1.0]],
                  dtype=jnp.float32)

    out = mlp_forward(x, params)
    jax.block_until_ready(out)

    # Reference check in plain JAX (same math as the PyTorch forward).
    h_ref = jax.nn.sigmoid(x @ w1.T + b1)
    y_ref = h_ref @ w2.T + b2
    assert out.shape == (4, 1)
    assert jnp.allclose(out, y_ref, atol=1e-5), (out, y_ref)

    print("KERNEL_OK")
</pallas_src>

<mosaic_0001>
module attributes {stable_mosaic.version = 11 : i64} {
  func.func @mlp_kernel(%arg0: i32, %arg1: memref<9xf32, #tpu.memory_space<smem>>, %arg2: memref<2x128xf32, #tpu.memory_space<vmem>>, %arg3: memref<1x128xf32, #tpu.memory_space<vmem>>) attributes {dimension_semantics = [#tpu.dimension_semantics<parallel>], iteration_bounds = array<i64: 1>, scalar_prefetch = 0 : i64, scratch_operands = 0 : i64, tpu.core_type = #tpu.core_type<tc>, window_params = [{transform_indices = @transform_0, window_bounds = array<i64: 9>}, {transform_indices = @transform_1, window_bounds = array<i64: 2, 128>}, {transform_indices = @transform_2, window_bounds = array<i64: 1, 128>}]} {
    %c0 = arith.constant 0 : index
    %c0_0 = arith.constant 0 : index
    %0 = vector.load %arg2[%c0, %c0_0] : memref<2x128xf32, #tpu.memory_space<vmem>>, vector<1x128xf32>
    %c1 = arith.constant 1 : index
    %c0_1 = arith.constant 0 : index
    %1 = vector.load %arg2[%c1, %c0_1] : memref<2x128xf32, #tpu.memory_space<vmem>>, vector<1x128xf32>
    %c0_2 = arith.constant 0 : index
    %2 = memref.load %arg1[%c0_2] : memref<9xf32, #tpu.memory_space<smem>>
    %3 = vector.broadcast %2 : f32 to vector<1x128xf32>
    %4 = arith.mulf %0, %3 : vector<1x128xf32>
    %c1_3 = arith.constant 1 : index
    %5 = memref.load %arg1[%c1_3] : memref<9xf32, #tpu.memory_space<smem>>
    %6 = vector.broadcast %5 : f32 to vector<1x128xf32>
    %7 = arith.mulf %1, %6 : vector<1x128xf32>
    %8 = arith.addf %4, %7 : vector<1x128xf32>
    %c4 = arith.constant 4 : index
    %9 = memref.load %arg1[%c4] : memref<9xf32, #tpu.memory_space<smem>>
    %10 = vector.broadcast %9 : f32 to vector<1x128xf32>
    %11 = arith.addf %8, %10 : vector<1x128xf32>
    %12 = arith.negf %11 : vector<1x128xf32>
    %13 = math.exp %12 : vector<1x128xf32>
    %cst = arith.constant 1.000000e+00 : f32
    %14 = vector.broadcast %cst : f32 to vector<1x128xf32>
    %15 = arith.addf %14, %13 : vector<1x128xf32>
    %16 = arith.divf %14, %15 : vector<1x128xf32>
    %c2 = arith.constant 2 : index
    %17 = memref.load %arg1[%c2] : memref<9xf32, #tpu.memory_space<smem>>
    %18 = vector.broadcast %17 : f32 to vector<1x128xf32>
    %19 = arith.mulf %0, %18 : vector<1x128xf32>
    %c3 = arith.constant 3 : index
    %20 = memref.load %arg1[%c3] : memref<9xf32, #tpu.memory_space<smem>>
    %21 = vector.broadcast %20 : f32 to vector<1x128xf32>
    %22 = arith.mulf %1, %21 : vector<1x128xf32>
    %23 = arith.addf %19, %22 : vector<1x128xf32>
    %c5 = arith.constant 5 : index
    %24 = memref.load %arg1[%c5] : memref<9xf32, #tpu.memory_space<smem>>
    %25 = vector.broadcast %24 : f32 to vector<1x128xf32>
    %26 = arith.addf %23, %25 : vector<1x128xf32>
    %27 = arith.negf %26 : vector<1x128xf32>
    %28 = math.exp %27 : vector<1x128xf32>
    %cst_4 = arith.constant 1.000000e+00 : f32
    %29 = vector.broadcast %cst_4 : f32 to vector<1x128xf32>
    %30 = arith.addf %29, %28 : vector<1x128xf32>
    %31 = arith.divf %29, %30 : vector<1x128xf32>
    %c6 = arith.constant 6 : index
    %32 = memref.load %arg1[%c6] : memref<9xf32, #tpu.memory_space<smem>>
    %33 = vector.broadcast %32 : f32 to vector<1x128xf32>
    %34 = arith.mulf %16, %33 : vector<1x128xf32>
    %c7 = arith.constant 7 : index
    %35 = memref.load %arg1[%c7] : memref<9xf32, #tpu.memory_space<smem>>
    %36 = vector.broadcast %35 : f32 to vector<1x128xf32>
    %37 = arith.mulf %31, %36 : vector<1x128xf32>
    %38 = arith.addf %34, %37 : vector<1x128xf32>
    %c8 = arith.constant 8 : index
    %39 = memref.load %arg1[%c8] : memref<9xf32, #tpu.memory_space<smem>>
    %40 = vector.broadcast %39 : f32 to vector<1x128xf32>
    %41 = arith.addf %38, %40 : vector<1x128xf32>
    %c0_5 = arith.constant 0 : index
    %c0_6 = arith.constant 0 : index
    %42 = vector.load %arg3[%c0_5, %c0_6] : memref<1x128xf32, #tpu.memory_space<vmem>>, vector<1x128xf32>
    tpu.vector_store %arg3[%c0_5, %c0_6], %41 {strides = array<i32>} : memref<1x128xf32, #tpu.memory_space<vmem>>, vector<1x128xf32>,
    return
  }
  func.func @transform_0(%arg0: i32) -> i32 {
    %c0_i32 = arith.constant 0 : i32
    %c0_i32_0 = arith.constant 0 : i32
    return %c0_i32 : i32
  }
  func.func @transform_1(%arg0: i32) -> (i32, i32) {
    %c0_i32 = arith.constant 0 : i32
    %c0_i32_0 = arith.constant 0 : i32
    return %c0_i32, %arg0 : i32, i32
  }
  func.func @transform_2(%arg0: i32) -> (i32, i32) {
    %c0_i32 = arith.constant 0 : i32
    %c0_i32_0 = arith.constant 0 : i32
    return %c0_i32, %arg0 : i32, i32
  }
}

</mosaic_0001>

<llo_original>
// kernel: tpu_custom_call.1
$region0: #{tpu_custom_call.1}
  #allocation0 [shape = 'u32[]', space=smem, size = 0x4, offset = 0x4, fixed_abs, tag = 'smem constant byte address 0x4 - core index']
  #allocation1 [shape = 'u32[144,128]{1,0:T(1,128)}', space=vmem, size = 0x12000, scoped, tag = 'internal scratch']
  %s0 = inlined_call_operand.hbm [shape: f32[9], index: 0, kind: input, shape index: {}]
  %s1 = inlined_call_operand.hbm [shape: f32[2,128], index: 1, kind: input, shape index: {}]
  %s2 = inlined_call_operand.hbm [shape: f32[1,128], index: 2, kind: output, shape index: {}]
  %s3 = sld [smem:[#allocation0]]
  $region26: #{tpu_custom_call.1} parent=0
    _
  %s5 = ssub.s32 1, %s3
  %s6 = scalar_select 0, %s5, %s3
  $region1: #{tpu_custom_call.1} parent=0
    #allocation2 [shape = 'u8[512]{0}', space=smem, size = 0x200, scoped, tag = 'input window, operand 0, single buffered']
    #allocation3 [shape = 's32[1]{0}', space=sflag, size = 0x4, scoped, tag = 'scoped memory for tpu_custom_call.1']
    #allocation4 [shape = 's32[1]{0}', space=sflag, size = 0x4, scoped, tag = 'scoped memory for tpu_custom_call.1']
    #allocation5 [shape = 's32[1]{0}', space=sflag, size = 0x4, scoped, tag = 'scoped memory for tpu_custom_call.1']
    #allocation6 [shape = 'u8[1024]{0}', space=vmem, size = 0x400, scoped, tag = 'input window, operand 1, single buffered']
    #allocation7 [shape = 'u8[512]{0}', space=vmem, size = 0x400, scoped, tag = 'output window, operand 0, single buffered']
    %7 = vsyncpa [#allocation5], 0
    %8 = vsyncpa [#allocation3], 0
    %9 = vsyncpa [#allocation4], 0
    // Predicated region
    $region2: #{tpu_custom_call.1} parent=1 // pred_check
      _
    $region3: #{tpu_custom_call.1} parent=1 // pred_check_branch
      %11 = sbr.rel (0) target = $region5
    $region4: #{tpu_custom_call.1} parent=1 // pred_region
      %s13 = ssub.s32 16, 16
      %14 = vsyncadd [#allocation5], %s13
      %17 = dma.hbm_to_smem %s0, 16, [#allocation2], [#allocation5]
    $region5: #{tpu_custom_call.1} parent=1 // pred_fallthru
      _
    // Predicated region
    $region6: #{tpu_custom_call.1} parent=1 // pred_check
      _
    $region7: #{tpu_custom_call.1} parent=1 // pred_check_branch
      %19 = sbr.rel (0) target = $region9
    $region8: #{tpu_custom_call.1} parent=1 // pred_region
      %s21 = ssub.s32 32, 32
      %22 = vsyncadd [#allocation3], %s21
      %s24 = sshll.u32 [#allocation6], 4
      %s25 = int_to_ptr.vmem [resolvable:$true] %s24
      %27 = dma.hbm_to_vmem [thread:$0]  %s1, 32, %s25, [#allocation3]
    $region9: #{tpu_custom_call.1} parent=1 // pred_fallthru
      _
    // Predicated region
    $region10: #{tpu_custom_call.1} parent=1 // pred_check
      _
    $region11: #{tpu_custom_call.1} parent=1 // pred_check_branch
      %29 = sbr.rel (0) target = $region13
    $region12: #{tpu_custom_call.1} parent=1 // pred_region
      %30 = dma.done [#allocation5], 16
    $region13: #{tpu_custom_call.1} parent=1 // pred_fallthru
      _
    // Predicated region
    $region14: #{tpu_custom_call.1} parent=1 // pred_check
      _
    $region15: #{tpu_custom_call.1} parent=1 // pred_check_branch
      %32 = sbr.rel (0) target = $region17
    $region16: #{tpu_custom_call.1} parent=1 // pred_region
      %33 = dma.done [#allocation3], 32
    $region17: #{tpu_custom_call.1} parent=1 // pred_fallthru
      _
    %34 = sfence
    %v35 = vld [vmem:[#allocation6] sm:$0x1]
    %v36 = vld [vmem:[#allocation6 + $0x1] sm:$0x1]
    %s37 = sld [smem:[#allocation2]]
    %v38 = vstv %s37
    %v39 = vmul.f32 %v35, %v38
    %s40 = sld [smem:[#allocation2 + $0x1]]
    %v41 = vstv %s40
    %v42 = vmul.f32 %v36, %v41
    %v43 = vadd.f32 %v39, %v42
    %s44 = sld [smem:[#allocation2 + $0x4]]
    %v45 = vstv %s44
    %v46 = vadd.f32 %v43, %v45
    %v47 = vxor.u32 %v46, 2147483648
    %v48 = vmul.f32 %v47, 1.442695
    %v49 = vpow.pop %v48
    %v50 = vadd.f32 %v49, 1.0
    %v51 = vrcp.pop %v50
    %v52 = vmul.f32 1.0, %v51
    %s53 = sld [smem:[#allocation2 + $0x2]]
    %v54 = vstv %s53
    %v55 = vmul.f32 %v35, %v54
    %s56 = sld [smem:[#allocation2 + $0x3]]
    %v57 = vstv %s56
    %v58 = vmul.f32 %v36, %v57
    %v59 = vadd.f32 %v55, %v58
    %s60 = sld [smem:[#allocation2 + $0x5]]
    %v61 = vstv %s60
    %v62 = vadd.f32 %v59, %v61
    %v63 = vxor.u32 %v62, 2147483648
    %v64 = vmul.f32 %v63, 1.442695
    %v65 = vpow.pop %v64
    %v66 = vadd.f32 %v65, 1.0
    %v67 = vrcp.pop %v66
    %v68 = vmul.f32 1.0, %v67
    %s69 = sld [smem:[#allocation2 + $0x6]]
    %v70 = vstv %s69
    %v71 = vmul.f32 %v52, %v70
    %s72 = sld [smem:[#allocation2 + $0x7]]
    %v73 = vstv %s72
    %v74 = vmul.f32 %v68, %v73
    %v75 = vadd.f32 %v71, %v74
    %s76 = sld [smem:[#allocation2 + $0x8]]
    %v77 = vstv %s76
    %v78 = vadd.f32 %v75, %v77
    %79 = vst [vmem:[#allocation7] sm:$0x1] %v78
    // Predicated region
    $region18: #{tpu_custom_call.1} parent=1 // pred_check
      _
    $region19: #{tpu_custom_call.1} parent=1 // pred_check_branch
      %81 = sbr.rel (0) target = $region21
    $region20: #{tpu_custom_call.1} parent=1 // pred_region
      %s83 = ssub.s32 16, 16
      %84 = vsyncadd [#allocation4], %s83
      %s86 = sshll.u32 [#allocation7], 4
      %s87 = int_to_ptr.vmem [resolvable:$true] %s86
      %89 = dma.vmem_to_hbm [thread:$0]  %s87, 16, %s2, [#allocation4]
    $region21: #{tpu_custom_call.1} parent=1 // pred_fallthru
      _
    // Predicated region
    $region22: #{tpu_custom_call.1} parent=1 // pred_check
      _
    $region23: #{tpu_custom_call.1} parent=1 // pred_check_branch
      %91 = sbr.rel (0) target = $region25
    $region24: #{tpu_custom_call.1} parent=1 // pred_region
      %92 = dma.done [#allocation4], 16
    $region25: #{tpu_custom_call.1} parent=1 // pred_fallthru
      _
    %93 = vsyncpa [#allocation3], 1
    %94 = vsyncpa [#allocation4], 1
    %95 = vsyncpa [#allocation5], 1

</llo_original>
